<compile_context>
chip_gen: v7x
topology: tpu7x:2x2x1
jax: 0.10.0
libtpu: 0.0.40
codegen_flags: <defaults>
</compile_context>

<pallas_src>
import jax
import jax.numpy as jnp
from jax.experimental import pallas as pl
from jax.experimental.pallas import tpu as pltpu

F_SRC = 64
F_DST = 64
F_EDGE = 1
F_IN = F_SRC + F_DST + F_EDGE   # 129 = Linear in_features
F_OUT = 80                      # Linear out_features


def _round_up(x, m):
    return ((x + m - 1) // m) * m


def _edge_mlp_kernel(src_ref, dst_ref, ea_ref, ws_ref, wd_ref, we_ref, b_ref,
                     o_ref):
    # src @ W_src  -> [tm, N]   (MXU)
    acc = jnp.dot(src_ref[...], ws_ref[...], preferred_element_type=jnp.float32)
    # dest @ W_dst -> [tm, N]   (MXU)
    acc = acc + jnp.dot(dst_ref[...], wd_ref[...],
                        preferred_element_type=jnp.float32)
    # edge_attr contribution
    if ea_ref.shape[-1] == 1:
        # K=1 contraction: broadcast multiply on the VPU (cheaper than a
        # degenerate MXU matmul):  [tm,1] * [1,N] -> [tm,N]
        acc = acc + ea_ref[...] * we_ref[...]
    else:
        acc = acc + jnp.dot(ea_ref[...], we_ref[...],
                            preferred_element_type=jnp.float32)
    # bias + ReLU (VPU)
    o_ref[...] = jnp.maximum(acc + b_ref[...], 0.0).astype(o_ref.dtype)


def edge_model_forward(src, dest, edge_attr, weight, bias, *, tm=128):
    """relu(cat([src, dest, edge_attr], 1) @ weight + bias) via Pallas.

    weight is the Linear weight in [in_features, out_features] = [129, 80]
    layout (i.e. torch weight.T); it is split row-wise to avoid the concat.
    """
    E = src.shape[0]
    fs, fd, fe = src.shape[1], dest.shape[1], edge_attr.shape[1]
    n = weight.shape[1]
    assert weight.shape[0] == fs + fd + fe

    w_s = weight[:fs]                  # [fs, n]
    w_d = weight[fs:fs + fd]           # [fd, n]
    w_e = weight[fs + fd:]             # [fe, n]
    bias2d = bias.reshape(1, n)

    # Row tile: rows are fully independent -> "parallel" grid axis.
    tm_eff = min(tm, _round_up(E, 8))
    e_pad = _round_up(E, tm_eff)
    if e_pad != E:
        pad = e_pad - E
        src = jnp.pad(src, ((0, pad), (0, 0)))
        dest = jnp.pad(dest, ((0, pad), (0, 0)))
        edge_attr = jnp.pad(edge_attr, ((0, pad), (0, 0)))

    grid = (e_pad // tm_eff,)
    flops = 2 * e_pad * (fs + fd + fe) * n
    bytes_accessed = 4 * (e_pad * (fs + fd + fe)      # inputs
                          + (fs + fd + fe) * n + n    # weights + bias
                          + e_pad * n)                # output

    out = pl.pallas_call(
        _edge_mlp_kernel,
        out_shape=jax.ShapeDtypeStruct((e_pad, n), jnp.float32),
        grid=grid,
        in_specs=[
            pl.BlockSpec((tm_eff, fs), lambda i: (i, 0)),   # src rows
            pl.BlockSpec((tm_eff, fd), lambda i: (i, 0)),   # dest rows
            pl.BlockSpec((tm_eff, fe), lambda i: (i, 0)),   # edge_attr rows
            pl.BlockSpec((fs, n), lambda i: (0, 0)),        # W_src (resident)
            pl.BlockSpec((fd, n), lambda i: (0, 0)),        # W_dst (resident)
            pl.BlockSpec((fe, n), lambda i: (0, 0)),        # W_edge (resident)
            pl.BlockSpec((1, n), lambda i: (0, 0)),         # bias
        ],
        out_specs=pl.BlockSpec((tm_eff, n), lambda i: (i, 0)),
        compiler_params=pltpu.CompilerParams(
            dimension_semantics=("parallel",)),
        cost_estimate=pl.CostEstimate(
            flops=flops, transcendentals=0, bytes_accessed=bytes_accessed),
    )(src, dest, edge_attr, w_s, w_d, w_e, bias2d)

    return out[:E]


def _reference(src, dest, edge_attr, weight, bias):
    h = jnp.concatenate([src, dest, edge_attr], axis=1)
    return jnp.maximum(h @ weight + bias[None, :], 0.0)


if __name__ == "__main__":
    key = jax.random.PRNGKey(0)
    k_s, k_d, k_e, k_w, k_b = jax.random.split(key, 5)

    # Small shapes consistent with the module: 2*64 node feats + 1 edge feat = 129.
    E = 16
    src = jax.random.normal(k_s, (E, F_SRC), dtype=jnp.float32)
    dest = jax.random.normal(k_d, (E, F_DST), dtype=jnp.float32)
    edge_attr = jax.random.normal(k_e, (E, F_EDGE), dtype=jnp.float32)

    # Linear(129, 80) parameters, stored as [in, out] (= torch weight.T).
    weight = (jax.random.normal(k_w, (F_IN, F_OUT), dtype=jnp.float32)
              * jnp.sqrt(1.0 / F_IN))
    bias = jax.random.normal(k_b, (F_OUT,), dtype=jnp.float32) * 0.01

    out = edge_model_forward(src, dest, edge_attr, weight, bias)
    out = jax.block_until_ready(out)
    ref = _reference(src, dest, edge_attr, weight, bias)
    assert out.shape == (E, F_OUT)
    assert jnp.allclose(out, ref, atol=1e-4, rtol=1e-4)

    # Second case: more rows than one tile + a non-multiple-of-8 row count,
    # exercising the multi-step parallel grid and the pad/slice path.
    E2 = 300
    k_s2, k_d2, k_e2 = jax.random.split(jax.random.PRNGKey(1), 3)
    src2 = jax.random.normal(k_s2, (E2, F_SRC), dtype=jnp.float32)
    dest2 = jax.random.normal(k_d2, (E2, F_DST), dtype=jnp.float32)
    edge_attr2 = jax.random.normal(k_e2, (E2, F_EDGE), dtype=jnp.float32)

    out2 = edge_model_forward(src2, dest2, edge_attr2, weight, bias)
    out2 = jax.block_until_ready(out2)
    ref2 = _reference(src2, dest2, edge_attr2, weight, bias)
    assert out2.shape == (E2, F_OUT)
    assert jnp.allclose(out2, ref2, atol=1e-4, rtol=1e-4)

    print("KERNEL_OK")
</pallas_src>

<mosaic_0001>
module attributes {stable_mosaic.version = 11 : i64} {
  func.func @_edge_mlp_kernel(%arg0: i32, %arg1: memref<16x64xf32, #tpu.memory_space<vmem>>, %arg2: memref<16x64xf32, #tpu.memory_space<vmem>>, %arg3: memref<16x1xf32, #tpu.memory_space<vmem>>, %arg4: memref<64x80xf32, #tpu.memory_space<vmem>>, %arg5: memref<64x80xf32, #tpu.memory_space<vmem>>, %arg6: memref<1x80xf32, #tpu.memory_space<vmem>>, %arg7: memref<1x80xf32, #tpu.memory_space<vmem>>, %arg8: memref<16x80xf32, #tpu.memory_space<vmem>>) attributes {dimension_semantics = [#tpu.dimension_semantics<parallel>], iteration_bounds = array<i64: 1>, scalar_prefetch = 0 : i64, scratch_operands = 0 : i64, tpu.core_type = #tpu.core_type<tc>, window_params = [{transform_indices = @transform_0, window_bounds = array<i64: 16, 64>}, {transform_indices = @transform_1, window_bounds = array<i64: 16, 64>}, {transform_indices = @transform_2, window_bounds = array<i64: 16, 1>}, {pipeline_mode = #tpu.pipeline_mode<synchronous>, transform_indices = @transform_3, window_bounds = array<i64: 64, 80>}, {pipeline_mode = #tpu.pipeline_mode<synchronous>, transform_indices = @transform_4, window_bounds = array<i64: 64, 80>}, {pipeline_mode = #tpu.pipeline_mode<synchronous>, transform_indices = @transform_5, window_bounds = array<i64: 1, 80>}, {pipeline_mode = #tpu.pipeline_mode<synchronous>, transform_indices = @transform_6, window_bounds = array<i64: 1, 80>}, {transform_indices = @transform_7, window_bounds = array<i64: 16, 80>}]} {
    %c0 = arith.constant 0 : index
    %c0_0 = arith.constant 0 : index
    %0 = vector.load %arg1[%c0, %c0_0] : memref<16x64xf32, #tpu.memory_space<vmem>>, vector<16x64xf32>
    %c0_1 = arith.constant 0 : index
    %c0_2 = arith.constant 0 : index
    %1 = vector.load %arg4[%c0_1, %c0_2] : memref<64x80xf32, #tpu.memory_space<vmem>>, vector<64x80xf32>
    %cst = arith.constant dense<0.000000e+00> : vector<16x80xf32>
    %2 = tpu.matmul %0, %1, %cst {dimension_numbers = #tpu.dot_dimension_numbers<[1], [0], [0], [1], [0, 0, 1, 1], [], []>} : vector<16x64xf32>, vector<64x80xf32>, vector<16x80xf32> -> vector<16x80xf32>
    %c0_3 = arith.constant 0 : index
    %c0_4 = arith.constant 0 : index
    %3 = vector.load %arg2[%c0_3, %c0_4] : memref<16x64xf32, #tpu.memory_space<vmem>>, vector<16x64xf32>
    %c0_5 = arith.constant 0 : index
    %c0_6 = arith.constant 0 : index
    %4 = vector.load %arg5[%c0_5, %c0_6] : memref<64x80xf32, #tpu.memory_space<vmem>>, vector<64x80xf32>
    %cst_7 = arith.constant dense<0.000000e+00> : vector<16x80xf32>
    %5 = tpu.matmul %3, %4, %cst_7 {dimension_numbers = #tpu.dot_dimension_numbers<[1], [0], [0], [1], [0, 0, 1, 1], [], []>} : vector<16x64xf32>, vector<64x80xf32>, vector<16x80xf32> -> vector<16x80xf32>
    %6 = arith.addf %2, %5 : vector<16x80xf32>
    %c0_8 = arith.constant 0 : index
    %c0_9 = arith.constant 0 : index
    %7 = vector.load %arg3[%c0_8, %c0_9] : memref<16x1xf32, #tpu.memory_space<vmem>>, vector<16x1xf32>
    %c0_10 = arith.constant 0 : index
    %c0_11 = arith.constant 0 : index
    %8 = vector.load %arg6[%c0_10, %c0_11] : memref<1x80xf32, #tpu.memory_space<vmem>>, vector<1x80xf32>
    %9 = vector.broadcast %7 : vector<16x1xf32> to vector<16x80xf32>
    %10 = vector.broadcast %8 : vector<1x80xf32> to vector<16x80xf32>
    %11 = arith.mulf %9, %10 : vector<16x80xf32>
    %12 = arith.addf %6, %11 : vector<16x80xf32>
    %c0_12 = arith.constant 0 : index
    %c0_13 = arith.constant 0 : index
    %13 = vector.load %arg7[%c0_12, %c0_13] : memref<1x80xf32, #tpu.memory_space<vmem>>, vector<1x80xf32>
    %14 = vector.broadcast %13 : vector<1x80xf32> to vector<16x80xf32>
    %15 = arith.addf %12, %14 : vector<16x80xf32>
    %cst_14 = arith.constant 0.000000e+00 : f32
    %16 = vector.broadcast %cst_14 : f32 to vector<16x80xf32>
    %17 = arith.maximumf %15, %16 : vector<16x80xf32>
    %c0_15 = arith.constant 0 : index
    %c0_16 = arith.constant 0 : index
    %18 = vector.load %arg8[%c0_15, %c0_16] : memref<16x80xf32, #tpu.memory_space<vmem>>, vector<16x80xf32>
    tpu.vector_store %arg8[%c0_15, %c0_16], %17 {strides = array<i32>} : memref<16x80xf32, #tpu.memory_space<vmem>>, vector<16x80xf32>,
    return
  }
  func.func @transform_0(%arg0: i32) -> (i32, i32) {
    %c0_i32 = arith.constant 0 : i32
    %c0_i32_0 = arith.constant 0 : i32
    return %arg0, %c0_i32 : i32, i32
  }
  func.func @transform_1(%arg0: i32) -> (i32, i32) {
    %c0_i32 = arith.constant 0 : i32
    %c0_i32_0 = arith.constant 0 : i32
    return %arg0, %c0_i32 : i32, i32
  }
  func.func @transform_2(%arg0: i32) -> (i32, i32) {
    %c0_i32 = arith.constant 0 : i32
    %c0_i32_0 = arith.constant 0 : i32
    return %arg0, %c0_i32 : i32, i32
  }
  func.func @transform_3(%arg0: i32) -> (i32, i32) {
    %c0_i32 = arith.constant 0 : i32
    %c0_i32_0 = arith.constant 0 : i32
    %c0_i32_1 = arith.constant 0 : i32
    return %c0_i32, %c0_i32_0 : i32, i32
  }
  func.func @transform_4(%arg0: i32) -> (i32, i32) {
    %c0_i32 = arith.constant 0 : i32
    %c0_i32_0 = arith.constant 0 : i32
    %c0_i32_1 = arith.constant 0 : i32
    return %c0_i32, %c0_i32_0 : i32, i32
  }
  func.func @transform_5(%arg0: i32) -> (i32, i32) {
    %c0_i32 = arith.constant 0 : i32
    %c0_i32_0 = arith.constant 0 : i32
    %c0_i32_1 = arith.constant 0 : i32
    return %c0_i32, %c0_i32_0 : i32, i32
  }
  func.func @transform_6(%arg0: i32) -> (i32, i32) {
    %c0_i32 = arith.constant 0 : i32
    %c0_i32_0 = arith.constant 0 : i32
    %c0_i32_1 = arith.constant 0 : i32
    return %c0_i32, %c0_i32_0 : i32, i32
  }
  func.func @transform_7(%arg0: i32) -> (i32, i32) {
    %c0_i32 = arith.constant 0 : i32
    %c0_i32_0 = arith.constant 0 : i32
    return %arg0, %c0_i32 : i32, i32
  }
}

</mosaic_0001>

<llo_original>
// kernel: tpu_custom_call.1
$region0: #{tpu_custom_call.1}
  #allocation0 [shape = 'u32[]', space=smem, size = 0x4, offset = 0x4, fixed_abs, tag = 'smem constant byte address 0x4 - core index']
  #allocation1 [shape = 'u32[144,128]{1,0:T(1,128)}', space=vmem, size = 0x12000, scoped, tag = 'internal scratch']
  %s0 = inlined_call_operand.vmem [shape: f32[16,64], index: 0, kind: input, shape index: {}]
  %s1 = inlined_call_operand.hbm [shape: f32[16,64], index: 1, kind: input, shape index: {}]
  %s2 = inlined_call_operand.vmem [shape: f32[16,1], index: 2, kind: input, shape index: {}]
  %s3 = inlined_call_operand.hbm [shape: f32[64,80], index: 3, kind: input, shape index: {}]
  %s4 = inlined_call_operand.hbm [shape: f32[64,80], index: 4, kind: input, shape index: {}]
  %s5 = inlined_call_operand.vmem [shape: f32[1,80], index: 5, kind: input, shape index: {}]
  %s6 = inlined_call_operand.vmem [shape: f32[1,80], index: 6, kind: input, shape index: {}]
  %s7 = inlined_call_operand.hbm [shape: f32[16,80], index: 7, kind: output, shape index: {}]
  %s8 = sld [smem:[#allocation0]]
  $region50: #{tpu_custom_call.1} parent=0
    _
  %s10 = ssub.s32 1, %s8
  %s11 = scalar_select 0, %s10, %s8
  $region1: #{tpu_custom_call.1} parent=0
    #allocation2 [shape = 'u8[8192]{0}', space=vmem, size = 0x2000, scoped, tag = 'input window, operand 1, single buffered']
    #allocation3 [shape = 's32[1]{0}', space=sflag, size = 0x4, scoped, tag = 'scoped memory for tpu_custom_call.1']
    #allocation4 [shape = 's32[1]{0}', space=sflag, size = 0x4, scoped, tag = 'scoped memory for tpu_custom_call.1']
    #allocation5 [shape = 'u8[32768]{0}', space=vmem, size = 0x8000, scoped, tag = 'input window, operand 3, single buffered']
    #allocation6 [shape = 's32[1]{0}', space=sflag, size = 0x4, scoped, tag = 'scoped memory for tpu_custom_call.1']
    #allocation7 [shape = 'u8[32768]{0}', space=vmem, size = 0x8000, scoped, tag = 'input window, operand 4, single buffered']
    #allocation8 [shape = 'u8[8192]{0}', space=vmem, size = 0x2000, scoped, tag = 'output window, operand 0, single buffered']
    %12 = vsyncpa [#allocation3], 0
    %13 = vsyncpa [#allocation6], 0
    %14 = vsyncpa [#allocation4], 0
    // Predicated region
    $region2: #{tpu_custom_call.1} parent=1 // pred_check
      _
    $region3: #{tpu_custom_call.1} parent=1 // pred_check_branch
      %16 = sbr.rel (0) target = $region5
    $region4: #{tpu_custom_call.1} parent=1 // pred_region
      _
    $region5: #{tpu_custom_call.1} parent=1 // pred_fallthru
      _
    // Predicated region
    $region6: #{tpu_custom_call.1} parent=1 // pred_check
      _
    $region7: #{tpu_custom_call.1} parent=1 // pred_check_branch
      %18 = sbr.rel (0) target = $region9
    $region8: #{tpu_custom_call.1} parent=1 // pred_region
      %s20 = ssub.s32 256, 256
      %21 = vsyncadd [#allocation3], %s20
      %s22 = sshll.u32 [#allocation2], 4
      %s23 = int_to_ptr.vmem [resolvable:$true] %s22
      %28 = dma.hbm_to_vmem [thread:$0]  %s1, 256, %s23, [#allocation3], 128, 128, 8
    $region9: #{tpu_custom_call.1} parent=1 // pred_fallthru
      _
    // Predicated region
    $region10: #{tpu_custom_call.1} parent=1 // pred_check
      _
    $region11: #{tpu_custom_call.1} parent=1 // pred_check_branch
      %30 = sbr.rel (0) target = $region13
    $region12: #{tpu_custom_call.1} parent=1 // pred_region
      _
    $region13: #{tpu_custom_call.1} parent=1 // pred_fallthru
      _
    // Predicated region
    $region14: #{tpu_custom_call.1} parent=1 // pred_check
      _
    $region15: #{tpu_custom_call.1} parent=1 // pred_check_branch
      %32 = sbr.rel (0) target = $region17
    $region16: #{tpu_custom_call.1} parent=1 // pred_region
      %s34 = ssub.s32 1024, 1024
      %35 = vsyncadd [#allocation6], %s34
      %s36 = sshll.u32 [#allocation5], 4
      %s37 = int_to_ptr.vmem [resolvable:$true] %s36
      %42 = dma.hbm_to_vmem [thread:$0]  %s3, 1024, %s37, [#allocation6], 128, 128, 8
    $region17: #{tpu_custom_call.1} parent=1 // pred_fallthru
      _
    // Predicated region
    $region18: #{tpu_custom_call.1} parent=1 // pred_check
      _
    $region19: #{tpu_custom_call.1} parent=1 // pred_check_branch
      %44 = sbr.rel (0) target = $region21
    $region20: #{tpu_custom_call.1} parent=1 // pred_region
      %s46 = ssub.s32 1024, 1024
      %47 = vsyncadd [#allocation6], %s46
      %s48 = sshll.u32 [#allocation7], 4
      %s49 = int_to_ptr.vmem [resolvable:$true] %s48
      %54 = dma.hbm_to_vmem [thread:$0]  %s4, 1024, %s49, [#allocation6], 128, 128, 8
    $region21: #{tpu_custom_call.1} parent=1 // pred_fallthru
      _
    // Predicated region
    $region22: #{tpu_custom_call.1} parent=1 // pred_check
      _
    $region23: #{tpu_custom_call.1} parent=1 // pred_check_branch
      %56 = sbr.rel (0) target = $region25
    $region24: #{tpu_custom_call.1} parent=1 // pred_region
      _
    $region25: #{tpu_custom_call.1} parent=1 // pred_fallthru
      _
    // Predicated region
    $region26: #{tpu_custom_call.1} parent=1 // pred_check
      _
    $region27: #{tpu_custom_call.1} parent=1 // pred_check_branch
      %58 = sbr.rel (0) target = $region29
    $region28: #{tpu_custom_call.1} parent=1 // pred_region
      _
    $region29: #{tpu_custom_call.1} parent=1 // pred_fallthru
      _
    // Predicated region
    $region30: #{tpu_custom_call.1} parent=1 // pred_check
      _
    $region31: #{tpu_custom_call.1} parent=1 // pred_check_branch
      %60 = sbr.rel (0) target = $region33
    $region32: #{tpu_custom_call.1} parent=1 // pred_region
      %61 = dma.done [#allocation3], 256
    $region33: #{tpu_custom_call.1} parent=1 // pred_fallthru
      _
    // Predicated region
    $region34: #{tpu_custom_call.1} parent=1 // pred_check
      _
    $region35: #{tpu_custom_call.1} parent=1 // pred_check_branch
      %63 = sbr.rel (0) target = $region37
    $region36: #{tpu_custom_call.1} parent=1 // pred_region
      %64 = dma.done [#allocation6], 1024
    $region37: #{tpu_custom_call.1} parent=1 // pred_fallthru
      _
    // Predicated region
    $region38: #{tpu_custom_call.1} parent=1 // pred_check
      _
    $region39: #{tpu_custom_call.1} parent=1 // pred_check_branch
      %66 = sbr.rel (0) target = $region41
    $region40: #{tpu_custom_call.1} parent=1 // pred_region
      %67 = dma.done [#allocation6], 1024
    $region41: #{tpu_custom_call.1} parent=1 // pred_fallthru
      _
    %v68 = vld [vmem:[%s0] sm:$0xff]
    %v69 = vld [vmem:[%s0 + $0x8] sm:$0xff]
    %v70 = vld [vmem:[#allocation5] sm:$0xff]
    %v71 = vld [vmem:[#allocation5 + $0x8] sm:$0xff]
    %v72 = vld [vmem:[#allocation5 + $0x10] sm:$0xff]
    %v73 = vld [vmem:[#allocation5 + $0x18] sm:$0xff]
    %v74 = vld [vmem:[#allocation5 + $0x20] sm:$0xff]
    %v75 = vld [vmem:[#allocation5 + $0x28] sm:$0xff]
    %v76 = vld [vmem:[#allocation5 + $0x30] sm:$0xff]
    %v77 = vld [vmem:[#allocation5 + $0x38] sm:$0xff]
    %v78 = vld [vmem:[#allocation2] sm:$0xff]
    %v79 = vld [vmem:[#allocation2 + $0x8] sm:$0xff]
    %v80 = vld [vmem:[#allocation7] sm:$0xff]
    %v81 = vld [vmem:[#allocation7 + $0x8] sm:$0xff]
    %v82 = vld [vmem:[#allocation7 + $0x10] sm:$0xff]
    %v83 = vld [vmem:[#allocation7 + $0x18] sm:$0xff]
    %v84 = vld [vmem:[#allocation7 + $0x20] sm:$0xff]
    %v85 = vld [vmem:[#allocation7 + $0x28] sm:$0xff]
    %v86 = vld [vmem:[#allocation7 + $0x30] sm:$0xff]
    %v87 = vld [vmem:[#allocation7 + $0x38] sm:$0xff]
    %vm88 = vcmask 523264
    %v90 = vsel %vm88, %v78, 0
    %v93 = vsel %vm88, %v79, 0
    %95 = vmatprep.subr.mxu0 0.0
    %96 = vmatpush1.msra.mxu0 %v80
    %97 = vmatprep.subr.mxu0 0.0
    %98 = vmatpush1.msra.mxu0 %v81
    %99 = vmatprep.subr.mxu0 0.0
    %100 = vmatpush1.msra.mxu0 %v82
    %101 = vmatprep.subr.mxu0 0.0
    %102 = vmatpush1.msra.mxu0 %v83
    %103 = vmatprep.subr.mxu0 0.0
    %104 = vmatpush1.msra.mxu0 %v84
    %105 = vmatprep.subr.mxu0 0.0
    %106 = vmatpush1.msra.mxu0 %v85
    %107 = vmatprep.subr.mxu0 0.0
    %108 = vmatpush1.msra.mxu0 %v86
    %109 = vmatprep.subr.mxu0 0.0
    %110 = vmatpush1.msra.mxu0 %v87
    %111 = vmatprep.subr.mxu0 0.0
    %112 = vmatpush1.msra.mxu0 0.0
    %113 = vmatprep.subr.mxu0 0.0
    %114 = vmatpush1.msra.mxu0 0.0
    %115 = vmatprep.subr.mxu0 0.0
    %116 = vmatpush1.msra.mxu0 0.0
    %117 = vmatprep.subr.mxu0 0.0
    %118 = vmatpush1.msra.mxu0 0.0
    %119 = vmatprep.subr.mxu0 0.0
    %120 = vmatpush1.msra.mxu0 0.0
    %121 = vmatprep.subr.mxu0 0.0
    %122 = vmatpush1.msra.mxu0 0.0
    %123 = vmatprep.subr.mxu0 0.0
    %124 = vmatpush1.msra.mxu0 0.0
    %125 = vmatprep.subr.mxu0 0.0
    %126 = vmatpush1.msra.mxu0 0.0
    %127 = vmatprep.subr.mxu0 0.0
    %128 = vmatpush1.msra.mxu0 0.0
    %129 = vmatprep.subr.mxu0 0.0
    %130 = vmatpush1.msra.mxu0 0.0
    %131 = vmatprep.subr.mxu0 0.0
    %132 = vmatpush1.msra.mxu0 0.0
    %133 = vmatprep.subr.mxu0 0.0
    %134 = vmatpush1.msra.mxu0 0.0
    %135 = vmatprep.subr.mxu0 0.0
    %136 = vmatpush1.msra.mxu0 0.0
    %137 = vmatprep.subr.mxu0 0.0
    %138 = vmatpush1.msra.mxu0 0.0
    %139 = vmatprep.subr.mxu0 0.0
    %140 = vmatpush1.msra.mxu0 0.0
    %141 = vmatprep.subr.mxu0 0.0
    %142 = vmatpush1.msra.mxu0 0.0
    %143 = vmatprep.subr.mxu0 0.0
    %144 = vmatpush1.msra.mxu0 0.0
    %145 = vmatprep.subr.mxu0 0.0
    %146 = vmatpush1.msra.mxu0 0.0
    %147 = vmatprep.subr.mxu0 0.0
    %148 = vmatpush1.msra.mxu0 0.0
    %149 = vmatprep.subr.mxu0 0.0
    %150 = vmatpush1.msra.mxu0 0.0
    %151 = vmatprep.subr.mxu0 0.0
    %152 = vmatpush1.msra.mxu0 0.0
    %153 = vmatprep.subr.mxu0 0.0
    %154 = vmatpush1.msra.mxu0 0.0
    %155 = vmatprep.subr.mxu0 0.0
    %156 = vmatpush1.msra.mxu0 0.0
    %157 = vmatprep.subr.mxu0 0.0
    %158 = vmatpush1.msra.mxu0 0.0
    %159 = vmatprep.mubr.f32.mxu0 0.0
    %160 = vmatmul.mubr.f32.gmra.mrb[0].mxu0 %v90
    %v161 = vpop.f32.mrb[0].mxu0
    %v162 = vadd.f32 0.0, %v161
    %v163 = vpop.f32.mrb[0].mxu0
    %164 = vmatprep.mubr.f32.mxu0 0.0
    %165 = vmatmul.mubr.f32.gmra.mrb[0].mxu0 %v93
    %v166 = vpop.f32.mrb[0].mxu0
    %v167 = vadd.f32 0.0, %v166
    %v168 = vpop.f32.mrb[0].mxu0
    %169 = vdwg.mxu0
    %v171 = vsel %vm88, %v68, 0
    %v174 = vsel %vm88, %v69, 0
    %176 = vmatprep.subr.mxu0 0.0
    %177 = vmatpush1.msra.mxu0 %v70
    %178 = vmatprep.subr.mxu0 0.0
    %179 = vmatpush1.msra.mxu0 %v71
    %180 = vmatprep.subr.mxu0 0.0
    %181 = vmatpush1.msra.mxu0 %v72
    %182 = vmatprep.subr.mxu0 0.0
    %183 = vmatpush1.msra.mxu0 %v73
    %184 = vmatprep.subr.mxu0 0.0
    %185 = vmatpush1.msra.mxu0 %v74
    %186 = vmatprep.subr.mxu0 0.0
    %187 = vmatpush1.msra.mxu0 %v75
    %188 = vmatprep.subr.mxu0 0.0
    %189 = vmatpush1.msra.mxu0 %v76
    %190 = vmatprep.subr.mxu0 0.0
    %191 = vmatpush1.msra.mxu0 %v77
    %192 = vmatprep.subr.mxu0 0.0
    %193 = vmatpush1.msra.mxu0 0.0
    %194 = vmatprep.subr.mxu0 0.0
    %195 = vmatpush1.msra.mxu0 0.0
    %196 = vmatprep.subr.mxu0 0.0
    %197 = vmatpush1.msra.mxu0 0.0
    %198 = vmatprep.subr.mxu0 0.0
    %199 = vmatpush1.msra.mxu0 0.0
    %200 = vmatprep.subr.mxu0 0.0
    %201 = vmatpush1.msra.mxu0 0.0
    %202 = vmatprep.subr.mxu0 0.0
    %203 = vmatpush1.msra.mxu0 0.0
    %204 = vmatprep.subr.mxu0 0.0
    %205 = vmatpush1.msra.mxu0 0.0
    %206 = vmatprep.subr.mxu0 0.0
    %207 = vmatpush1.msra.mxu0 0.0
    %208 = vmatprep.subr.mxu0 0.0
    %209 = vmatpush1.msra.mxu0 0.0
    %210 = vmatprep.subr.mxu0 0.0
    %211 = vmatpush1.msra.mxu0 0.0
    %212 = vmatprep.subr.mxu0 0.0
    %213 = vmatpush1.msra.mxu0 0.0
    %214 = vmatprep.subr.mxu0 0.0
    %215 = vmatpush1.msra.mxu0 0.0
    %216 = vmatprep.subr.mxu0 0.0
    %217 = vmatpush1.msra.mxu0 0.0
    %218 = vmatprep.subr.mxu0 0.0
    %219 = vmatpush1.msra.mxu0 0.0
    %220 = vmatprep.subr.mxu0 0.0
    %221 = vmatpush1.msra.mxu0 0.0
    %222 = vmatprep.subr.mxu0 0.0
    %223 = vmatpush1.msra.mxu0 0.0
    %224 = vmatprep.subr.mxu0 0.0
    %225 = vmatpush1.msra.mxu0 0.0
    %226 = vmatprep.subr.mxu0 0.0
    %227 = vmatpush1.msra.mxu0 0.0
    %228 = vmatprep.subr.mxu0 0.0
    %229 = vmatpush1.msra.mxu0 0.0
    %230 = vmatprep.subr.mxu0 0.0
    %231 = vmatpush1.msra.mxu0 0.0
    %232 = vmatprep.subr.mxu0 0.0
    %233 = vmatpush1.msra.mxu0 0.0
    %234 = vmatprep.subr.mxu0 0.0
    %235 = vmatpush1.msra.mxu0 0.0
    %236 = vmatprep.subr.mxu0 0.0
    %237 = vmatpush1.msra.mxu0 0.0
    %238 = vmatprep.subr.mxu0 0.0
    %239 = vmatpush1.msra.mxu0 0.0
    %240 = vmatprep.mubr.f32.mxu0 0.0
    %241 = vmatmul.mubr.f32.gmra.mrb[0].mxu0 %v171
    %v242 = vpop.f32.mrb[0].mxu0
    %v243 = vadd.f32 %v162, %v242
    %v244 = vpop.f32.mrb[0].mxu0
    %245 = vmatprep.mubr.f32.mxu0 0.0
    %246 = vmatmul.mubr.f32.gmra.mrb[0].mxu0 %v174
    %v247 = vpop.f32.mrb[0].mxu0
    %v248 = vadd.f32 %v167, %v247
    %v249 = vpop.f32.mrb[0].mxu0
    %250 = vdwg.mxu0
    %v251 = vld [vmem:[%s2] sm:$0xff]
    %v252 = vld [vmem:[%s2 + $0x8] sm:$0xff]
    %v253 = vld [vmem:[%s5] sm:$0x1]
    %255 = vset.pattern.permute.xlu0 0
    %256 = vperm.xlu0 %255, %v251
    %v257 = vpop.permute.xlu0 %256
    %260 = vset.pattern.permute.xlu0 0
    %261 = vperm.xlu0 %260, %v252
    %v262 = vpop.permute.xlu0 %261
    %v265 = vlaneseq
    %v266 = vshrl.u32 %v265, 7
    %v267 = vsub.s32 0, %v266
    %v268 = vrot.slane %v253, %v267
    %v270 = vmul.f32 %v257, %v268
    %v271 = vmul.f32 %v262, %v268
    %v272 = vadd.f32 %v243, %v270
    %v273 = vadd.f32 %v248, %v271
    %v274 = vld [vmem:[%s6] sm:$0x1]
    %v276 = vlaneseq
    %v277 = vshrl.u32 %v276, 7
    %v278 = vsub.s32 0, %v277
    %v279 = vrot.slane %v274, %v278
    %v281 = vadd.f32 %v272, %v279
    %v282 = vadd.f32 %v273, %v279
    %v283 = vmax.f32 %v281, 0.0
    %v284 = vmax.f32 %v282, 0.0
    %vm285 = vcmask 654336
    %286 = vst.msk [vmem:[#allocation8] sm:$0xff] %vm285, %v283
    %287 = vst.msk [vmem:[#allocation8 + $0x8] sm:$0xff] %vm285, %v284
    // Predicated region
    $region42: #{tpu_custom_call.1} parent=1 // pred_check
      _
    $region43: #{tpu_custom_call.1} parent=1 // pred_check_branch
      %289 = sbr.rel (0) target = $region45
    $region44: #{tpu_custom_call.1} parent=1 // pred_region
      %s291 = ssub.s32 256, 256
      %292 = vsyncadd [#allocation4], %s291
      %s293 = sshll.u32 [#allocation8], 4
      %s294 = int_to_ptr.vmem [resolvable:$true] %s293
      %299 = dma.vmem_to_hbm [thread:$0]  %s294, 256, %s7, [#allocation4], 128, 128, 8
    $region45: #{tpu_custom_call.1} parent=1 // pred_fallthru
      _
    // Predicated region
    $region46: #{tpu_custom_call.1} parent=1 // pred_check
      _
    $region47: #{tpu_custom_call.1} parent=1 // pred_check_branch
      %301 = sbr.rel (0) target = $region49
    $region48: #{tpu_custom_call.1} parent=1 // pred_region
      %302 = dma.done [#allocation4], 256
    $region49: #{tpu_custom_call.1} parent=1 // pred_fallthru
      _
    %303 = vsyncpa [#allocation3], 1
    %304 = vsyncpa [#allocation6], 1
    %305 = vsyncpa [#allocation4], 1

</llo_original>
